<compile_context>
chip_gen: v5e
topology: v5e:2x2
jax: 0.10.0
libtpu: 0.0.40
codegen_flags: <defaults>
</compile_context>

<pallas_src>
import jax
import jax.numpy as jnp
from jax.experimental import pallas as pl
from jax.experimental.pallas import tpu as pltpu


def _round_up(x: int, m: int) -> int:
    return ((x + m - 1) // m) * m


def encode_obs_kernel(obs_ref, w_ref, b_ref, out_ref):
    # Pure MXU kernel: normalisation is already folded into w_ref / b_ref.
    out = jnp.dot(obs_ref[...], w_ref[...], preferred_element_type=jnp.float32)
    out_ref[...] = out + b_ref[...]          # [1, H_pad] bias broadcasts over rows


def fold_normaliser_into_linear(w, b, s_mu, s_std, *,
                                compute_dtype=jnp.bfloat16,
                                lane_pad=128, eps=1e-6):
    """One-time parameter transform (done once at model-load time).

    w:    [hidden, input_dim]  (PyTorch nn.Linear layout)
    b:    [hidden]
    s_mu, s_std: [input_dim]
    Returns (w_folded [input_dim, H_pad] compute_dtype,
             b_folded [1, H_pad] f32,
             hidden)  where H_pad = round_up(hidden, 128).
    """
    hidden, input_dim = w.shape
    std_safe = jnp.maximum(s_std.astype(jnp.float32), eps)
    inv_std = 1.0 / std_safe
    w_t = w.astype(jnp.float32).T                       # [input_dim, hidden]
    w_fold = inv_std[:, None] * w_t                     # diag(1/std) @ W^T
    b_fold = b.astype(jnp.float32) - (s_mu.astype(jnp.float32) * inv_std) @ w_t

    h_pad = _round_up(hidden, lane_pad)
    w_fold = jnp.pad(w_fold, ((0, 0), (0, h_pad - hidden)))
    b_fold = jnp.pad(b_fold, ((0, h_pad - hidden),)).reshape(1, h_pad)
    return w_fold.astype(compute_dtype), b_fold.astype(jnp.float32), hidden


def _vmem_budget_bytes(bm, input_dim, h_pad, obs_bytes, w_bytes):
    # 2x double-buffered obs/out tiles + resident weights/bias, with headroom.
    need = (2 * bm * input_dim * obs_bytes
            + 2 * bm * h_pad * 4
            + input_dim * h_pad * w_bytes
            + h_pad * 4)
    return int(min(2 * need + (4 << 20), 32 << 20))


def encode_obs(obs, w_folded, b_folded, *, block_m=256):
    """obs: [bsz, input_dim]; w_folded: [input_dim, H_pad]; b_folded: [1, H_pad].

    Returns [bsz, H_pad] f32 (caller slices [:, :hidden]).
    """
    bsz, input_dim = obs.shape
    h_pad = w_folded.shape[1]
    compute_dtype = w_folded.dtype
    obs_c = obs.astype(compute_dtype)

    # Batch tile: multiple of 8 sublanes, no larger than the (rounded) batch.
    bm = _round_up(min(block_m, _round_up(bsz, 8)), 8)
    grid = (pl.cdiv(bsz, bm),)

    obs_bytes = jnp.dtype(compute_dtype).itemsize
    vmem_limit = _vmem_budget_bytes(bm, input_dim, h_pad, obs_bytes, obs_bytes)

    # NOTE: if input_dim * h_pad ever becomes VMEM-relevant (e.g. 8192x8192),
    # add a K-axis grid with an f32 VMEM accumulator (pl.when init/finalize);
    # unnecessary at these layer sizes.
    return pl.pallas_call(
        encode_obs_kernel,
        out_shape=jax.ShapeDtypeStruct((bsz, h_pad), jnp.float32),
        grid_spec=pl.GridSpec(
            grid=grid,
            in_specs=[
                pl.BlockSpec((bm, input_dim), lambda i: (i, 0)),       # obs tile
                pl.BlockSpec((input_dim, h_pad), lambda i: (0, 0)),    # resident W'
                pl.BlockSpec((1, h_pad), lambda i: (0, 0)),            # resident b'
            ],
            out_specs=pl.BlockSpec((bm, h_pad), lambda i: (i, 0)),
        ),
        compiler_params=pltpu.CompilerParams(
            dimension_semantics=("parallel",),
            vmem_limit_bytes=vmem_limit,
        ),
    )(obs_c, w_folded, b_folded)


if __name__ == "__main__":
    # Shapes consistent with the module: obs [bsz, input_dim] -> [bsz, hidden].
    input_dim, hidden_size, action_dim = 16, 32, 4
    bsz = 512

    key = jax.random.PRNGKey(0)
    k_obs, k_w, k_b, k_std = jax.random.split(key, 4)

    obs = jax.random.normal(k_obs, (bsz, input_dim), dtype=jnp.float32)

    # Synthetic nn.Linear(input_dim, hidden) parameters (PyTorch layout).
    w_pt = jax.random.normal(k_w, (hidden_size, input_dim), dtype=jnp.float32) * 0.1
    b = jax.random.normal(k_b, (hidden_size,), dtype=jnp.float32) * 0.1

    # Normaliser stats (dataloader-provided in the original; synthetic here).
    s_mu = jnp.linspace(-0.5, 0.5, input_dim, dtype=jnp.float32)
    s_std = 0.5 + jax.nn.sigmoid(
        jax.random.normal(k_std, (input_dim,), dtype=jnp.float32))

    # Pure-JAX reference = the module semantics: Linear(snorm.normalize(obs)).
    ref = ((obs - s_mu[None, :]) / s_std[None, :]) @ w_pt.T + b[None, :]

    # --- f32 path (tight tolerance) -------------------------------------
    w_f32, b_f32, hidden = fold_normaliser_into_linear(
        w_pt, b, s_mu, s_std, compute_dtype=jnp.float32)
    out_f32 = encode_obs(obs, w_f32, b_f32, block_m=128)[:, :hidden]
    out_f32 = jax.block_until_ready(out_f32)
    assert out_f32.shape == (bsz, hidden_size)
    assert jnp.allclose(out_f32, ref, atol=1e-4, rtol=1e-4)

    # --- bf16 inputs, f32 accumulation (MXU-native) ----------------------
    w_bf, b_bf, hidden = fold_normaliser_into_linear(
        w_pt, b, s_mu, s_std, compute_dtype=jnp.bfloat16)
    out_bf = encode_obs(obs, w_bf, b_bf, block_m=128)[:, :hidden]
    out_bf = jax.block_until_ready(out_bf)
    assert jnp.allclose(out_bf, ref, atol=5e-2, rtol=5e-2)

    # --- ragged batch (partial last block is masked by Pallas) -----------
    out_rag = encode_obs(obs[:100], w_f32, b_f32, block_m=64)[:, :hidden]
    out_rag = jax.block_until_ready(out_rag)
    assert out_rag.shape == (100, hidden_size)
    assert jnp.allclose(out_rag, ref[:100], atol=1e-4, rtol=1e-4)

    print("KERNEL_OK")
</pallas_src>

<mosaic_0001>
module attributes {stable_mosaic.version = 11 : i64} {
  func.func @encode_obs_kernel(%arg0: i32, %arg1: memref<128x16xf32, #tpu.memory_space<vmem>>, %arg2: memref<16x128xf32, #tpu.memory_space<vmem>>, %arg3: memref<1x128xf32, #tpu.memory_space<vmem>>, %arg4: memref<128x128xf32, #tpu.memory_space<vmem>>) attributes {dimension_semantics = [#tpu.dimension_semantics<parallel>], iteration_bounds = array<i64: 4>, scalar_prefetch = 0 : i64, scratch_operands = 0 : i64, tpu.core_type = #tpu.core_type<tc>, window_params = [{transform_indices = @transform_0, window_bounds = array<i64: 128, 16>}, {pipeline_mode = #tpu.pipeline_mode<synchronous>, transform_indices = @transform_1, window_bounds = array<i64: 16, 128>}, {pipeline_mode = #tpu.pipeline_mode<synchronous>, transform_indices = @transform_2, window_bounds = array<i64: 1, 128>}, {transform_indices = @transform_3, window_bounds = array<i64: 128, 128>}]} {
    %c0 = arith.constant 0 : index
    %c0_0 = arith.constant 0 : index
    %0 = vector.load %arg1[%c0, %c0_0] : memref<128x16xf32, #tpu.memory_space<vmem>>, vector<128x16xf32>
    %c0_1 = arith.constant 0 : index
    %c0_2 = arith.constant 0 : index
    %1 = vector.load %arg2[%c0_1, %c0_2] : memref<16x128xf32, #tpu.memory_space<vmem>>, vector<16x128xf32>
    %cst = arith.constant dense<0.000000e+00> : vector<128x128xf32>
    %2 = tpu.matmul %0, %1, %cst {dimension_numbers = #tpu.dot_dimension_numbers<[1], [0], [0], [1], [0, 0, 1, 1], [], []>} : vector<128x16xf32>, vector<16x128xf32>, vector<128x128xf32> -> vector<128x128xf32>
    %c0_3 = arith.constant 0 : index
    %c0_4 = arith.constant 0 : index
    %3 = vector.load %arg3[%c0_3, %c0_4] : memref<1x128xf32, #tpu.memory_space<vmem>>, vector<1x128xf32>
    %4 = vector.broadcast %3 : vector<1x128xf32> to vector<128x128xf32>
    %5 = arith.addf %2, %4 : vector<128x128xf32>
    %c0_5 = arith.constant 0 : index
    %c0_6 = arith.constant 0 : index
    %6 = vector.load %arg4[%c0_5, %c0_6] : memref<128x128xf32, #tpu.memory_space<vmem>>, vector<128x128xf32>
    tpu.vector_store %arg4[%c0_5, %c0_6], %5 {strides = array<i32>} : memref<128x128xf32, #tpu.memory_space<vmem>>, vector<128x128xf32>,
    return
  }
  func.func @transform_0(%arg0: i32) -> (i32, i32) {
    %c0_i32 = arith.constant 0 : i32
    %c0_i32_0 = arith.constant 0 : i32
    return %arg0, %c0_i32 : i32, i32
  }
  func.func @transform_1(%arg0: i32) -> (i32, i32) {
    %c0_i32 = arith.constant 0 : i32
    %c0_i32_0 = arith.constant 0 : i32
    %c0_i32_1 = arith.constant 0 : i32
    return %c0_i32, %c0_i32_0 : i32, i32
  }
  func.func @transform_2(%arg0: i32) -> (i32, i32) {
    %c0_i32 = arith.constant 0 : i32
    %c0_i32_0 = arith.constant 0 : i32
    %c0_i32_1 = arith.constant 0 : i32
    return %c0_i32, %c0_i32_0 : i32, i32
  }
  func.func @transform_3(%arg0: i32) -> (i32, i32) {
    %c0_i32 = arith.constant 0 : i32
    %c0_i32_0 = arith.constant 0 : i32
    return %arg0, %c0_i32 : i32, i32
  }
}

</mosaic_0001>

<llo_original>
// kernel: tpu_custom_call.1
$region0: #{tpu_custom_call.1}
  #allocation0 [shape = 'u32[]', space=smem, size = 0x4, offset = 0x4, fixed_abs, tag = 'smem constant byte address 0x4 - core index']
  #allocation1 [shape = 'u32[72,128]{1,0:T(1,128)}', space=vmem, size = 0x9000, scoped, tag = 'internal scratch']
  %s0 = inlined_call_operand.vmem [shape: f32[512,16], index: 0, kind: input, shape index: {}]
  %s1 = inlined_call_operand.vmem [shape: f32[16,128], index: 1, kind: input, shape index: {}]
  %s2 = inlined_call_operand.vmem [shape: f32[1,128], index: 2, kind: input, shape index: {}]
  %s3 = inlined_call_operand.hbm [shape: f32[512,128], index: 3, kind: output, shape index: {}]
  %s4 = sld [smem:[#allocation0]]
  $region45: #{tpu_custom_call.1} parent=0
    _
  %s6 = ssub.s32 1, %s4
  %s7 = scalar_select 0, %s6, %s4
  $region1: #{tpu_custom_call.1} parent=0
    #allocation2 [shape = 'u8[131072]{0}', space=vmem, size = 0x20000, scoped, tag = 'output window, operand 0']
    #allocation3 [shape = 's32[2]{0}', space=sflag, size = 0x8, scoped, tag = 'scoped memory for tpu_custom_call.1']
    %8 = vsyncpa [#allocation3], 0
    %s9 = scalar_lea.sflag [#allocation3], 1
    %10 = vsyncpa %s9, 0
    loop: start=0, step=1, limit=6
    $region2: #{tpu_custom_call.1} parent=1 // loop_pre_header
      _
    $region3: #{tpu_custom_call.1} parent=1 // loop_header
      %s12 = sphi 0, %s16
      %p13 = scmp.ge.s32.totalorder %s12, 6
      %s22 = sphi 0, %s24
      %s25 = sphi 0, %s22
      %s26 = sphi 0, %s25
      %s42 = sphi 0, %s26
      %s46 = sphi 0, %s46
      %s48 = sphi 0, %s46
      %s49 = sphi 0, %s48
      %s63 = sphi 0, %s49
      %s67 = sphi 0, %s67
      %s69 = sphi 0, %s67
      %s70 = sphi 0, %s69
      %s84 = sphi 0, %s70
      %s90 = sphi 0, %s92
      %s93 = sphi 0, %s90
      %s94 = sphi 0, %s93
      %s110 = sphi 0, %s94
    $region4: #{tpu_custom_call.1} parent=1 // loop_header_branch
      %15 = sbr.rel (%p13) target = $region8
    $region5: #{tpu_custom_call.1} parent=1 // loop_body
      %s17 = ssub.s32 %s12, 1
      %s18 = ssub.s32 %s12, 2
      %s19 = sadd.s32 %s12, 1
      %s20 = ssub.s32 %s12, %s19
      %p21 = scmp.eq.s32.totalorder %s20, 0
      %s23 = sadd.s32 %s22, 1
      %s24 = scalar_select %p21, %s22, %s23
      %p27 = pneg %p21
      %p28 = scmp.eq.s32.totalorder %s12, 3
      %p29 = por %p27, %p28
      %p30 = scmp.ne.s32.totalorder %s22, %s25
      %p31 = scmp.eq.s32.totalorder %s12, 0
      %p32 = por %p30, %p31
      %p33 = scmp.ne.s32.totalorder %s22, %s25
      %p34 = scmp.eq.s32.totalorder %s17, 3
      %p35 = por %p33, %p34
      %p36 = scmp.ne.s32.totalorder %s25, %s26
      %p37 = scmp.eq.s32.totalorder %s17, 0
      %p38 = por %p36, %p37
      %p39 = scmp.ne.s32.totalorder %s25, %s26
      %p40 = scmp.eq.s32.totalorder %s18, 3
      %p41 = por %p39, %p40
      %p43 = scmp.ne.s32.totalorder %s26, %s42
      %p44 = scmp.eq.s32.totalorder %s18, 0
      %p45 = por %p43, %p44
      %s47 = sadd.s32 %s46, 1
      %p50 = scmp.eq.s32.totalorder %s12, 3
      %p51 = scmp.ne.s32.totalorder %s46, %s48
      %p52 = scmp.eq.s32.totalorder %s12, 0
      %p53 = por %p51, %p52
      %p54 = scmp.ne.s32.totalorder %s46, %s48
      %p55 = scmp.eq.s32.totalorder %s17, 3
      %p56 = por %p54, %p55
      %p57 = scmp.ne.s32.totalorder %s48, %s49
      %p58 = scmp.eq.s32.totalorder %s17, 0
      %p59 = por %p57, %p58
      %p60 = scmp.ne.s32.totalorder %s48, %s49
      %p61 = scmp.eq.s32.totalorder %s18, 3
      %p62 = por %p60, %p61
      %p64 = scmp.ne.s32.totalorder %s49, %s63
      %p65 = scmp.eq.s32.totalorder %s18, 0
      %p66 = por %p64, %p65
      %s68 = sadd.s32 %s67, 1
      %p71 = scmp.eq.s32.totalorder %s12, 3
      %p72 = scmp.ne.s32.totalorder %s67, %s69
      %p73 = scmp.eq.s32.totalorder %s12, 0
      %p74 = por %p72, %p73
      %p75 = scmp.ne.s32.totalorder %s67, %s69
      %p76 = scmp.eq.s32.totalorder %s17, 3
      %p77 = por %p75, %p76
      %p78 = scmp.ne.s32.totalorder %s69, %s70
      %p79 = scmp.eq.s32.totalorder %s17, 0
      %p80 = por %p78, %p79
      %p81 = scmp.ne.s32.totalorder %s69, %s70
      %p82 = scmp.eq.s32.totalorder %s18, 3
      %p83 = por %p81, %p82
      %p85 = scmp.ne.s32.totalorder %s70, %s84
      %p86 = scmp.eq.s32.totalorder %s18, 0
      %p87 = por %p85, %p86
      %s88 = ssub.s32 %s12, %s19
      %p89 = scmp.eq.s32.totalorder %s88, 0
      %s91 = sadd.s32 %s90, 1
      %s92 = scalar_select %p89, %s90, %s91
      %p95 = pneg %p89
      %p96 = scmp.eq.s32.totalorder %s12, 3
      %p97 = por %p95, %p96
      %p98 = scmp.ne.s32.totalorder %s90, %s93
      %p99 = scmp.eq.s32.totalorder %s12, 0
      %p100 = por %p98, %p99
      %p101 = scmp.ne.s32.totalorder %s90, %s93
      %p102 = scmp.eq.s32.totalorder %s17, 3
      %p103 = por %p101, %p102
      %p104 = scmp.ne.s32.totalorder %s93, %s94
      %p105 = scmp.eq.s32.totalorder %s17, 0
      %p106 = por %p104, %p105
      %p107 = scmp.ne.s32.totalorder %s93, %s94
      %p108 = scmp.eq.s32.totalorder %s18, 3
      %p109 = por %p107, %p108
      %p111 = scmp.ne.s32.totalorder %s94, %s110
      %p112 = scmp.eq.s32.totalorder %s18, 0
      %p113 = por %p111, %p112
      %p114 = scmp.le.s32.totalorder 1, %s12
      %p115 = scmp.lt.s32.totalorder %s12, 5
      %p116 = pnand %p114, %p115
      %p117 = pneg %p116
      // Predicated region
      $region9: #{tpu_custom_call.1} parent=5 // pred_check
        _
      $region10: #{tpu_custom_call.1} parent=5 // pred_check_branch
        %119 = sbr.rel (%p116) target = $region12
      $region11: #{tpu_custom_call.1} parent=5 // pred_region
        %s120 = ssub.s32 %s12, 1
        // Predicated region
        $region13: #{tpu_custom_call.1} parent=11 // pred_check
          %p121 = pneg %p59
        $region14: #{tpu_custom_call.1} parent=11 // pred_check_branch
          %123 = sbr.rel (%p121) target = $region16
        $region15: #{tpu_custom_call.1} parent=11 // pred_region
          _
        $region16: #{tpu_custom_call.1} parent=11 // pred_fallthru
          _
        // Predicated region
        $region17: #{tpu_custom_call.1} parent=11 // pred_check
          %p124 = pneg %p80
        $region18: #{tpu_custom_call.1} parent=11 // pred_check_branch
          %126 = sbr.rel (%p124) target = $region20
        $region19: #{tpu_custom_call.1} parent=11 // pred_region
          _
        $region20: #{tpu_custom_call.1} parent=11 // pred_fallthru
          _
      $region12: #{tpu_custom_call.1} parent=5 // pred_fallthru
        _
      %p127 = scmp.lt.s32.totalorder %s12, 4
      // Predicated region
      $region21: #{tpu_custom_call.1} parent=5 // pred_check
        %p128 = pneg %p127
      $region22: #{tpu_custom_call.1} parent=5 // pred_check_branch
        %130 = sbr.rel (%p128) target = $region24
      $region23: #{tpu_custom_call.1} parent=5 // pred_region
        // Predicated region
        $region25: #{tpu_custom_call.1} parent=23 // pred_check
          %p131 = pneg %p32
        $region26: #{tpu_custom_call.1} parent=23 // pred_check_branch
          %133 = sbr.rel (%p131) target = $region28
        $region27: #{tpu_custom_call.1} parent=23 // pred_region
          %s134 = smul.u32 16, %s12
          %p135 = scmp.lt.s32.totalorder %s134, 63
          %s136 = scalar_select %p135, %s134, 63
          %s137 = smul.addr %s136, 8
          %s138 = scalar_lea.vmem %s0, %s137
          %s139 = smul.u32 16, %s12
        $region28: #{tpu_custom_call.1} parent=23 // pred_fallthru
          _
      $region24: #{tpu_custom_call.1} parent=5 // pred_fallthru
        _
      %p140 = scmp.le.s32.totalorder 1, %s12
      %p141 = scmp.lt.s32.totalorder %s12, 5
      %p142 = pnand %p140, %p141
      %p143 = pneg %p142
      // Predicated region
      $region29: #{tpu_custom_call.1} parent=5 // pred_check
        _
      $region30: #{tpu_custom_call.1} parent=5 // pred_check_branch
        %145 = sbr.rel (%p142) target = $region32
      $region31: #{tpu_custom_call.1} parent=5 // pred_region
        %s146 = ssub.s32 %s12, 1
        %s147 = smul.u32 16, %s17
        %p148 = scmp.lt.s32.totalorder %s147, 63
        %s149 = scalar_select %p148, %s147, 63
        %s150 = smul.addr %s149, 8
        %s151 = scalar_lea.vmem %s0, %s150
        %p152 = pneg %p38
        %p153 = pneg %p35
        %p154 = pneg %p59
        %p155 = pneg %p56
        %p156 = pneg %p80
        %p157 = pneg %p77
        %p158 = pneg %p106
        %p159 = pneg %p103
        %s160 = sand.u32 %s93, 1
        %s161 = scalar_lea.sflag [#allocation3], %s160
        %s162 = sand.u32 %s93, 1
        %s163 = smul.addr %s162, 128
        %s164 = scalar_lea.vmem [#allocation2], %s163
        %s165 = smul.u32 16, %s17
        %p166 = scmp.lt.s32.totalorder %s165, 63
        %s167 = scalar_select %p166, %s165, 63
        %s168 = smul.addr %s167, 8
        %s169 = scalar_lea.vmem %s0, %s168
        %s170 = smul.u32 16, %s17
        %s171 = smul.u32 16, %s17
        %v172 = vld [vmem:[%s169] sm:$0xff]
        %v173 = vld [vmem:[%s169 + $0x8] sm:$0xff]
        %v174 = vld [vmem:[%s169 + $0x10] sm:$0xff]
        %v175 = vld [vmem:[%s169 + $0x18] sm:$0xff]
        %v176 = vld [vmem:[%s169 + $0x20] sm:$0xff]
        %v177 = vld [vmem:[%s169 + $0x28] sm:$0xff]
        %v178 = vld [vmem:[%s169 + $0x30] sm:$0xff]
        %v179 = vld [vmem:[%s169 + $0x38] sm:$0xff]
        %v180 = vld [vmem:[%s169 + $0x40] sm:$0xff]
        %v181 = vld [vmem:[%s169 + $0x48] sm:$0xff]
        %v182 = vld [vmem:[%s169 + $0x50] sm:$0xff]
        %v183 = vld [vmem:[%s169 + $0x58] sm:$0xff]
        %v184 = vld [vmem:[%s169 + $0x60] sm:$0xff]
        %v185 = vld [vmem:[%s169 + $0x68] sm:$0xff]
        %v186 = vld [vmem:[%s169 + $0x70] sm:$0xff]
        %v187 = vld [vmem:[%s169 + $0x78] sm:$0xff]
        %v188 = vld [vmem:[%s1] sm:$0xff]
        %v189 = vld [vmem:[%s1 + $0x8] sm:$0xff]
        %v190 = vld [vmem:[%s2] sm:$0x1]
        %v192 = vperm.slane %v190, 0
        %vm194 = vcmask 130048
        %v196 = vsel %vm194, %v172, 0
        %v199 = vsel %vm194, %v173, 0
        %v202 = vsel %vm194, %v174, 0
        %v205 = vsel %vm194, %v175, 0
        %v208 = vsel %vm194, %v176, 0
        %v211 = vsel %vm194, %v177, 0
        %v214 = vsel %vm194, %v178, 0
        %v217 = vsel %vm194, %v179, 0
        %v220 = vsel %vm194, %v180, 0
        %v223 = vsel %vm194, %v181, 0
        %v226 = vsel %vm194, %v182, 0
        %v229 = vsel %vm194, %v183, 0
        %v232 = vsel %vm194, %v184, 0
        %v235 = vsel %vm194, %v185, 0
        %v238 = vsel %vm194, %v186, 0
        %v241 = vsel %vm194, %v187, 0
        %243 = vmatpush.msra.mxu0 0.0
        %244 = vmatpush.msra.mxu0 0.0
        %245 = vmatpush.msra.mxu0 0.0
        %246 = vmatpush.msra.mxu0 0.0
        %247 = vmatpush.msra.mxu0 0.0
        %248 = vmatpush.msra.mxu0 0.0
        %249 = vmatpush.msra.mxu0 0.0
        %250 = vmatpush.msra.mxu0 0.0
        %251 = vmatpush.msra.mxu0 0.0
        %252 = vmatpush.msra.mxu0 0.0
        %253 = vmatpush.msra.mxu0 0.0
        %254 = vmatpush.msra.mxu0 0.0
        %255 = vmatpush.msra.mxu0 0.0
        %256 = vmatpush.msra.mxu0 0.0
        %257 = vmatpush.msra.mxu0 %v189
        %258 = vmatpush.msra.mxu0 %v188
        %259 = vmatmul.f32.gmra.mxu0 %v196
        %v260 = vpop.f32.mrf.mxu0
        %v261 = vadd.f32 %v192, %v260
        %262 = vmatmul.f32.gmra.mxu0 %v199
        %v263 = vpop.f32.mrf.mxu0
        %v264 = vadd.f32 %v192, %v263
        %265 = vmatmul.f32.gmra.mxu0 %v202
        %v266 = vpop.f32.mrf.mxu0
        %v267 = vadd.f32 %v192, %v266
        %268 = vmatmul.f32.gmra.mxu0 %v205
        %v269 = vpop.f32.mrf.mxu0
        %v270 = vadd.f32 %v192, %v269
        %271 = vmatmul.f32.gmra.mxu0 %v208
        %v272 = vpop.f32.mrf.mxu0
        %v273 = vadd.f32 %v192, %v272
        %274 = vmatmul.f32.gmra.mxu0 %v211
        %v275 = vpop.f32.mrf.mxu0
        %v276 = vadd.f32 %v192, %v275
        %277 = vmatmul.f32.gmra.mxu0 %v214
        %v278 = vpop.f32.mrf.mxu0
        %v279 = vadd.f32 %v192, %v278
        %280 = vmatmul.f32.gmra.mxu0 %v217
        %v281 = vpop.f32.mrf.mxu0
        %v282 = vadd.f32 %v192, %v281
        %283 = vmatmul.f32.gmra.mxu0 %v220
        %v284 = vpop.f32.mrf.mxu0
        %v285 = vadd.f32 %v192, %v284
        %286 = vmatmul.f32.gmra.mxu0 %v223
        %v287 = vpop.f32.mrf.mxu0
        %v288 = vadd.f32 %v192, %v287
        %289 = vmatmul.f32.gmra.mxu0 %v226
        %v290 = vpop.f32.mrf.mxu0
        %v291 = vadd.f32 %v192, %v290
        %292 = vmatmul.f32.gmra.mxu0 %v229
        %v293 = vpop.f32.mrf.mxu0
        %v294 = vadd.f32 %v192, %v293
        %295 = vmatmul.f32.gmra.mxu0 %v232
        %v296 = vpop.f32.mrf.mxu0
        %v297 = vadd.f32 %v192, %v296
        %298 = vmatmul.f32.gmra.mxu0 %v235
        %v299 = vpop.f32.mrf.mxu0
        %v300 = vadd.f32 %v192, %v299
        %301 = vmatmul.f32.gmra.mxu0 %v238
        %v302 = vpop.f32.mrf.mxu0
        %v303 = vadd.f32 %v192, %v302
        %304 = vmatmul.f32.gmra.mxu0 %v241
        %v305 = vpop.f32.mrf.mxu0
        %v306 = vadd.f32 %v192, %v305
        %307 = vdwg.mxu0
        %308 = vst [vmem:[%s164] sm:$0xff] %v261
        %309 = vst [vmem:[%s164 + $0x8] sm:$0xff] %v264
        %310 = vst [vmem:[%s164 + $0x10] sm:$0xff] %v267
        %311 = vst [vmem:[%s164 + $0x18] sm:$0xff] %v270
        %312 = vst [vmem:[%s164 + $0x20] sm:$0xff] %v273
        %313 = vst [vmem:[%s164 + $0x28] sm:$0xff] %v276
        %314 = vst [vmem:[%s164 + $0x30] sm:$0xff] %v279
        %315 = vst [vmem:[%s164 + $0x38] sm:$0xff] %v282
        %316 = vst [vmem:[%s164 + $0x40] sm:$0xff] %v285
        %317 = vst [vmem:[%s164 + $0x48] sm:$0xff] %v288
        %318 = vst [vmem:[%s164 + $0x50] sm:$0xff] %v291
        %319 = vst [vmem:[%s164 + $0x58] sm:$0xff] %v294
        %320 = vst [vmem:[%s164 + $0x60] sm:$0xff] %v297
        %321 = vst [vmem:[%s164 + $0x68] sm:$0xff] %v300
        %322 = vst [vmem:[%s164 + $0x70] sm:$0xff] %v303
        %323 = vst [vmem:[%s164 + $0x78] sm:$0xff] %v306
        %s324 = sand.u32 %s93, 1
        %s325 = scalar_lea.sflag [#allocation3], %s324
        %s326 = sand.u32 %s93, 1
        %s327 = smul.addr %s326, 128
        %s328 = scalar_lea.vmem [#allocation2], %s327
        // Predicated region
        $region33: #{tpu_custom_call.1} parent=31 // pred_check
          %p329 = pneg %p103
        $region34: #{tpu_custom_call.1} parent=31 // pred_check_branch
          %331 = sbr.rel (%p329) target = $region36
        $region35: #{tpu_custom_call.1} parent=31 // pred_region
          %s332 = smul.u32 16, %s17
          %334 = vsyncadd %s325, 0
          %s335 = smul.addr %s332, 8
          %s336 = scalar_lea.hbm %s3, %s335
          %s337 = sshll.u32 %s328, 4
          %s338 = int_to_ptr.vmem [resolvable:$true] %s337
          %s339 = sshll.u32 %s336, 4
          %s340 = int_to_ptr.hbm [resolvable:$true] %s339
          %345 = dma.vmem_to_hbm [thread:$0]  %s338, 2048, %s340, %s325, 128, 128, 8
        $region36: #{tpu_custom_call.1} parent=31 // pred_fallthru
          _
      $region32: #{tpu_custom_call.1} parent=5 // pred_fallthru
        _
      %p346 = scmp.le.s32.totalorder 2, %s12
      // Predicated region
      $region37: #{tpu_custom_call.1} parent=5 // pred_check
        %p347 = pneg %p346
      $region38: #{tpu_custom_call.1} parent=5 // pred_check_branch
        %349 = sbr.rel (%p347) target = $region40
      $region39: #{tpu_custom_call.1} parent=5 // pred_region
        %s350 = ssub.s32 %s12, 2
        // Predicated region
        $region41: #{tpu_custom_call.1} parent=39 // pred_check
          %p351 = pneg %p109
        $region42: #{tpu_custom_call.1} parent=39 // pred_check_branch
          %353 = sbr.rel (%p351) target = $region44
        $region43: #{tpu_custom_call.1} parent=39 // pred_region
          %s354 = sand.u32 %s94, 1
          %s355 = scalar_lea.sflag [#allocation3], %s354
          %s356 = sand.u32 %s94, 1
          %s357 = smul.addr %s356, 128
          %s358 = scalar_lea.vmem [#allocation2], %s357
          %360 = dma.done %s355, 2048
        $region44: #{tpu_custom_call.1} parent=39 // pred_fallthru
          _
      $region40: #{tpu_custom_call.1} parent=5 // pred_fallthru
        _
    $region6: #{tpu_custom_call.1} parent=1 // loop_footer
      %s16 = sadd.s32 1, %s12
    $region7: #{tpu_custom_call.1} parent=1 // loop_footer_branch
      %11 = sbr.rel target = $region3
    $region8: #{tpu_custom_call.1} parent=1 // loop_exit
      _
    %361 = vsyncpa [#allocation3], 1
    %s362 = scalar_lea.sflag [#allocation3], 1
    %363 = vsyncpa %s362, 1

</llo_original>
